<compile_context>
chip_gen: v6e
topology: v6e:2x2x1
jax: 0.10.0
libtpu: 0.0.40
codegen_flags: <defaults>
</compile_context>

<pallas_src>
import numpy as np
import jax
import jax.numpy as jnp
from jax import lax
from jax.experimental import pallas as pl
from jax.experimental.pallas import tpu as pltpu

_BN_EPS = 1e-5
# bf16 weights + bf16 MXU inputs, f32 accumulate / epilogue.  Flip to
# jnp.float32 to validate at the tighter 5e-3 tolerance.
WEIGHT_DTYPE = jnp.bfloat16


# ----------------------------------------------------------------------------
# Helpers
# ----------------------------------------------------------------------------
def _ceil_to(x, m):
    return ((x + m - 1) // m) * m


def _pad2(a, rows, cols):
    out = np.zeros((rows, cols), np.float32)
    a = np.asarray(a, np.float32)
    out[: a.shape[0], : a.shape[1]] = a
    return out


def conv1d_size_out(size, kernel_size, stride):
    return (size - (kernel_size - 1) - 1) // stride + 1


class Config:
    input_size_case = 4
    input_size_process = 3
    length = 16
    nr_cnn_layers = 2
    nr_out_channels = 10
    kernel_size = 2
    stride = 1
    nr_dense_layers = 2
    dense_width = 20
    nr_outputs = 1


# ----------------------------------------------------------------------------
# Deterministic PyTorch-layout parameter init (numpy, float32)
# ----------------------------------------------------------------------------
def init_raw_params(cfg, key):
    def uni(k, shape, bound):
        return np.asarray(jax.random.uniform(k, shape, jnp.float32, -bound, bound))

    raw = {"conv": [], "bn": [], "dense": []}
    L = cfg.length
    for nr in range(cfg.nr_cnn_layers):
        c_in = (cfg.input_size_process + 1) if nr == 0 else cfg.nr_out_channels
        c_out = cfg.nr_out_channels
        bound = 1.0 / np.sqrt(c_in * cfg.kernel_size)
        key, k1, k2, k3, k4, k5, k6 = jax.random.split(key, 7)
        raw["conv"].append((uni(k1, (c_out, c_in, cfg.kernel_size), bound),
                            uni(k2, (c_out,), bound)))
        # BatchNorm1d eval-mode params / running stats (randomized so the
        # folding is actually exercised).
        gamma = 0.5 + np.asarray(jax.random.uniform(k3, (c_out,), jnp.float32))
        beta = uni(k4, (c_out,), 0.5)
        mean = uni(k5, (c_out,), 0.5)
        var = 0.5 + np.asarray(jax.random.uniform(k6, (c_out,), jnp.float32))
        raw["bn"].append((gamma, beta, mean, var))
        L = conv1d_size_out(L, cfg.kernel_size, cfg.stride)
    assert L > 0, "too many conv layers / too large kernel or stride"
    linear_input_size = L * cfg.nr_out_channels

    d_prev = cfg.input_size_case + linear_input_size
    for nr in range(cfg.nr_dense_layers):
        d_in = d_prev if nr == 0 else cfg.dense_width
        bound = 1.0 / np.sqrt(d_in)
        key, k1, k2 = jax.random.split(key, 3)
        raw["dense"].append((uni(k1, (cfg.dense_width, d_in), bound),
                             uni(k2, (cfg.dense_width,), bound)))

    bound = 1.0 / np.sqrt(cfg.dense_width)
    key, k1, k2 = jax.random.split(key, 3)
    raw["last"] = (uni(k1, (10, cfg.dense_width), bound), uni(k2, (10,), bound))

    bound = 1.0 / np.sqrt(10)
    key, k1, k2, k3, k4 = jax.random.split(key, 5)
    raw["mean"] = (uni(k1, (cfg.nr_outputs, 10), bound),
                   uni(k2, (cfg.nr_outputs,), bound))
    raw["logvar"] = (uni(k3, (1, 10), bound), uni(k4, (1,), bound))
    return raw


# ----------------------------------------------------------------------------
# One-time parameter prep: fold BN, conv -> block-Toeplitz dense, transpose /
# pad all Linear weights, then pack everything into a few HBM slabs.
# ----------------------------------------------------------------------------
def prepare_kernel_params(cfg, raw, weight_dtype=WEIGHT_DTYPE):
    assert cfg.nr_cnn_layers >= 1 and cfg.nr_dense_layers >= 1
    dc = cfg.input_size_case

    mats = []  # per layer: (padded f32 weight (rows,cols), padded f32 bias (cols,))

    # ---- Conv1d + BatchNorm1d layers folded into dense matmuls ----
    L_in = cfg.length
    d_in = (cfg.input_size_process + 1) * L_in
    d_in_pad = _ceil_to(d_in, 128)
    d0, d0_pad = d_in, d_in_pad
    for nr in range(cfg.nr_cnn_layers):
        w, b = raw["conv"][nr]                          # (Cout, Cin, K), (Cout,)
        gamma, beta, mu, var = raw["bn"][nr]
        s = gamma / np.sqrt(var + _BN_EPS)              # BN fold in f32 numpy
        w_eff = w * s[:, None, None]
        b_eff = b * s + beta - mu * s
        c_out, c_in, K = w.shape
        L_out = conv1d_size_out(L_in, K, cfg.stride)
        d_out = c_out * L_out
        last = (nr == cfg.nr_cnn_layers - 1)
        # leave room in the last conv layer's padded lanes to splice x_case
        d_out_pad = _ceil_to(d_out + (dc if last else 0), 128)
        Wd = np.zeros((c_in * L_in, d_out), np.float32)
        j = np.arange(L_out)
        for co in range(c_out):
            for ci in range(c_in):
                for k in range(K):
                    Wd[ci * L_in + j * cfg.stride + k, co * L_out + j] = w_eff[co, ci, k]
        bd = np.repeat(b_eff, L_out)
        mats.append((_pad2(Wd, d_in_pad, d_out_pad),
                     _pad2(bd[None, :], 1, d_out_pad)[0]))
        L_in, d_in, d_in_pad = L_out, d_out, d_out_pad
    d_last, d_last_pad = d_in, d_in_pad

    # ---- dense layer 0: x_case weight rows folded in at lanes d_last..+dc ----
    dw = cfg.dense_width
    dw_pad = _ceil_to(dw, 128)
    W0, b0 = raw["dense"][0]                            # (dw, dc + d_last)
    Wc = np.zeros((d_last_pad, dw_pad), np.float32)
    Wc[:d_last, :dw] = W0[:, dc:].T
    Wc[d_last:d_last + dc, :dw] = W0[:, :dc].T
    mats.append((Wc, _pad2(b0[None, :], 1, dw_pad)[0]))

    # ---- remaining dense layers ----
    for nr in range(1, cfg.nr_dense_layers):
        W, b = raw["dense"][nr]
        mats.append((_pad2(W.T, dw_pad, dw_pad), _pad2(b[None, :], 1, dw_pad)[0]))

    # ---- last_layer (dense_width -> 10) ----
    Wl, bl = raw["last"]
    d10_pad = _ceil_to(10, 128)
    mats.append((_pad2(Wl.T, dw_pad, d10_pad), _pad2(bl[None, :], 1, d10_pad)[0]))

    # ---- combined [mean | logvar] head -> one lane-dense (B,128) store ----
    Wm, bm = raw["mean"]
    Wv, bv = raw["logvar"]
    Wout = np.concatenate([Wm.T, Wv.T], axis=1)         # (10, nr_outputs + 1)
    bout = np.concatenate([bm, bv])
    out_pad = 128
    mats.append((_pad2(Wout, d10_pad, out_pad), _pad2(bout[None, :], 1, out_pad)[0]))

    # ---- pack weights: one vertical slab per distinct padded width ----
    widths = sorted({W.shape[1] for W, _ in mats})
    buckets = {w: [] for w in widths}
    offsets = {w: 0 for w in widths}
    meta = []                                           # (slab_id, row0, rows, cols)
    for W, _ in mats:
        w = W.shape[1]
        meta.append((widths.index(w), offsets[w], W.shape[0], w))
        buckets[w].append(W)
        offsets[w] += W.shape[0]
    slabs = tuple(jnp.asarray(np.concatenate(buckets[w], axis=0), weight_dtype)
                  for w in widths)

    # ---- biases: one small f32 slab, row i = layer i's bias ----
    n_layers = len(mats)
    bmax = max(widths)
    bias_np = np.zeros((_ceil_to(n_layers, 8), bmax), np.float32)
    for i, (_, b) in enumerate(mats):
        bias_np[i, : b.shape[0]] = b
    bias_slab = jnp.asarray(bias_np)

    dims = dict(d0=d0, d0_pad=d0_pad, d_last=d_last, d_last_pad=d_last_pad,
                dc=dc, out_pad=out_pad, meta=tuple(meta), n_slabs=len(slabs),
                n_conv=cfg.nr_cnn_layers, n_dense=cfg.nr_dense_layers)
    return slabs, bias_slab, dims


# ----------------------------------------------------------------------------
# Single fused Pallas kernel: conv stack + dense head, all VMEM-resident.
# ----------------------------------------------------------------------------
def make_fused_kernel(dims, compute_dtype):
    n_conv, n_dense = dims["n_conv"], dims["n_dense"]
    n_slabs, meta = dims["n_slabs"], dims["meta"]
    d0_pad, d_last_pad = dims["d0_pad"], dims["d_last_pad"]

    def kernel(*refs):
        x_ref = refs[0]
        slab_refs = refs[1:1 + n_slabs]
        b_ref = refs[1 + n_slabs]
        out_ref = refs[2 + n_slabs]

        def layer(h, li, relu):
            sid, r0, nrows, ncols = meta[li]
            w = slab_refs[sid][r0:r0 + nrows, :]          # static view of the slab
            b = b_ref[li:li + 1, :ncols]                  # f32 bias row
            y = jnp.dot(h.astype(compute_dtype), w,
                        preferred_element_type=jnp.float32) + b
            return jnp.maximum(y, 0.0) if relu else y

        # Conv1d + BatchNorm1d + ReLU stack (block-Toeplitz matmuls).
        h = x_ref[:, :d0_pad]
        for li in range(n_conv):
            h = layer(h, li, True)

        # Splice x_case into the (all-zero) spare padded lanes of the last conv
        # activation; dense layer 0's weight rows match, so it stays one matmul.
        h = h + x_ref[:, d0_pad:d0_pad + d_last_pad]

        # dense stack + last_layer (all with ReLU).
        for li in range(n_conv, n_conv + n_dense + 1):
            h = layer(h, li, True)

        # combined [mean | logvar] head -- single lane-dense store.
        out_ref[...] = layer(h, n_conv + n_dense + 1, False)

    return kernel


def build_forward(cfg, slabs, bias_slab, dims, compute_dtype=WEIGHT_DTYPE):
    kernel = make_fused_kernel(dims, compute_dtype)
    vmem = pl.BlockSpec(memory_space=pltpu.MemorySpace.VMEM)
    n_in = 1 + dims["n_slabs"] + 1
    d0, d0_pad = dims["d0"], dims["d0_pad"]
    d_last, d_last_pad = dims["d_last"], dims["d_last_pad"]
    dc, out_pad = dims["dc"], dims["out_pad"]

    weight_bytes = sum(int(np.prod(s.shape)) * s.dtype.itemsize for s in slabs)
    weight_bytes += int(np.prod(bias_slab.shape)) * bias_slab.dtype.itemsize
    flops_per_row = 2 * sum(nr * nc for (_, _, nr, nc) in dims["meta"])

    @jax.jit
    def forward(x_case, x_process, t):
        B = x_case.shape[0]
        b_pad = _ceil_to(B, 8)                          # sublane-align batch (f32)
        # cat((x_process, t.reshape(B,1,L)), dim=1) flattened row-major (c*L+l),
        # packed together with x_case (placed at lanes d0_pad+d_last..+dc) into
        # ONE input buffer -> one DMA, no zeros().at[].set() scatter buffers.
        x_flat = jnp.concatenate(
            [x_process.reshape(B, -1), t.reshape(B, -1)], axis=1).astype(jnp.float32)
        x_packed = jnp.concatenate(
            [x_flat,
             jnp.zeros((B, d0_pad - d0 + d_last), jnp.float32),
             x_case.astype(jnp.float32),
             jnp.zeros((B, d_last_pad - d_last - dc), jnp.float32)], axis=1)
        x_packed = jnp.pad(x_packed, ((0, b_pad - B), (0, 0)))

        cost = pl.CostEstimate(
            flops=b_pad * flops_per_row, transcendentals=0,
            bytes_accessed=weight_bytes + x_packed.size * 4 + b_pad * out_pad * 4)

        out = pl.pallas_call(
            kernel,
            out_shape=jax.ShapeDtypeStruct((b_pad, out_pad), jnp.float32),
            in_specs=[vmem] * n_in,
            out_specs=vmem,
            cost_estimate=cost,
            # TODO(synk): add a batch grid axis with dimension_semantics=
            # ("parallel",) (tile sized for v7x's 64 MiB VMEM) when B grows.
        )(x_packed, *slabs, bias_slab)

        mean = out[:B, : cfg.nr_outputs]
        logvar = out[:B, cfg.nr_outputs: cfg.nr_outputs + 1]
        return mean, logvar

    return forward


# ----------------------------------------------------------------------------
# Pure-JAX reference (eval mode) for the correctness check.
# ----------------------------------------------------------------------------
def reference_forward(cfg, raw, x_case, x_process, t):
    hp = lax.Precision.HIGHEST
    B, _, L = x_process.shape
    x = jnp.concatenate([x_process, t.reshape(B, 1, L)], axis=1).astype(jnp.float32)
    for nr in range(cfg.nr_cnn_layers):
        w, b = raw["conv"][nr]
        gamma, beta, mu, var = raw["bn"][nr]
        w = jnp.asarray(w)
        K = w.shape[2]
        L_out = conv1d_size_out(x.shape[2], K, cfg.stride)
        cols = []
        for j in range(L_out):
            win = x[:, :, j * cfg.stride: j * cfg.stride + K]
            cols.append(jnp.einsum("bck,ock->bo", win, w, precision=hp))
        y = jnp.stack(cols, axis=-1) + jnp.asarray(b)[None, :, None]
        y = ((y - mu[None, :, None]) / np.sqrt(var + _BN_EPS)[None, :, None]
             * gamma[None, :, None] + beta[None, :, None])
        x = jnp.maximum(y, 0.0)
    h = jnp.concatenate([x_case.astype(jnp.float32), x.reshape(B, -1)], axis=1)
    for nr in range(cfg.nr_dense_layers):
        W, b = raw["dense"][nr]
        h = jnp.maximum(jnp.dot(h, jnp.asarray(W).T, precision=hp) + jnp.asarray(b), 0.0)
    Wl, bl = raw["last"]
    h = jnp.maximum(jnp.dot(h, jnp.asarray(Wl).T, precision=hp) + jnp.asarray(bl), 0.0)
    Wm, bm = raw["mean"]
    Wv, bv = raw["logvar"]
    mean = jnp.dot(h, jnp.asarray(Wm).T, precision=hp) + jnp.asarray(bm)
    logvar = jnp.dot(h, jnp.asarray(Wv).T, precision=hp) + jnp.asarray(bv)
    return mean, logvar


if __name__ == "__main__":
    cfg = Config()
    B = 4

    key = jax.random.PRNGKey(0)
    key, kp, k1, k2, k3 = jax.random.split(key, 5)
    raw = init_raw_params(cfg, kp)
    slabs, bias_slab, dims = prepare_kernel_params(cfg, raw)
    forward = build_forward(cfg, slabs, bias_slab, dims)

    x_case = jax.random.normal(k1, (B, cfg.input_size_case), jnp.float32)
    x_process = jax.random.normal(k2, (B, cfg.input_size_process, cfg.length),
                                  jnp.float32)
    t = jax.random.normal(k3, (B, cfg.length), jnp.float32)

    mean, logvar = forward(x_case, x_process, t)
    mean, logvar = jax.block_until_ready((mean, logvar))
    assert mean.shape == (B, cfg.nr_outputs), mean.shape
    assert logvar.shape == (B, 1), logvar.shape

    ref_mean, ref_logvar = reference_forward(cfg, raw, x_case, x_process, t)
    # bf16 weight/activation rounding compounds over ~7 chained matmuls; the
    # f32 path (WEIGHT_DTYPE = jnp.float32) validates at the tighter 5e-3.
    tol = 5e-3 if WEIGHT_DTYPE == jnp.float32 else 2e-2
    np.testing.assert_allclose(np.asarray(mean), np.asarray(ref_mean),
                               rtol=tol, atol=tol)
    np.testing.assert_allclose(np.asarray(logvar), np.asarray(ref_logvar),
                               rtol=tol, atol=tol)
    print("KERNEL_OK")
</pallas_src>

<mosaic_0001>
module attributes {stable_mosaic.version = 11 : i64} {
  func.func @kernel(%arg0: memref<8x384xf32, #tpu.memory_space<vmem>>, %arg1: memref<640x128xbf16, #tpu.memory_space<vmem>>, %arg2: memref<384x256xbf16, #tpu.memory_space<vmem>>, %arg3: memref<8x256xf32, #tpu.memory_space<vmem>>, %arg4: memref<8x128xf32, #tpu.memory_space<vmem>>) attributes {dimension_semantics = [], scalar_prefetch = 0 : i64, scratch_operands = 0 : i64, tpu.core_type = #tpu.core_type<tc>} {
    %c0 = arith.constant 0 : index
    %c0_0 = arith.constant 0 : index
    %0 = vector.load %arg0[%c0, %c0_0] : memref<8x384xf32, #tpu.memory_space<vmem>>, vector<8x128xf32>
    %c0_1 = arith.constant 0 : index
    %c0_2 = arith.constant 0 : index
    %1 = vector.load %arg2[%c0_1, %c0_2] : memref<384x256xbf16, #tpu.memory_space<vmem>>, vector<128x256xbf16>
    %c0_3 = arith.constant 0 : index
    %c0_4 = arith.constant 0 : index
    %2 = vector.load %arg3[%c0_3, %c0_4] : memref<8x256xf32, #tpu.memory_space<vmem>>, vector<1x256xf32>
    %3 = arith.truncf %0 : vector<8x128xf32> to vector<8x128xbf16>
    %cst = arith.constant dense<0.000000e+00> : vector<8x256xf32>
    %4 = tpu.matmul %3, %1, %cst {dimension_numbers = #tpu.dot_dimension_numbers<[1], [0], [0], [1], [0, 0, 1, 1], [], []>} : vector<8x128xbf16>, vector<128x256xbf16>, vector<8x256xf32> -> vector<8x256xf32>
    %5 = vector.broadcast %2 : vector<1x256xf32> to vector<8x256xf32>
    %6 = arith.addf %4, %5 : vector<8x256xf32>
    %cst_5 = arith.constant 0.000000e+00 : f32
    %7 = vector.broadcast %cst_5 : f32 to vector<8x256xf32>
    %8 = arith.maximumf %6, %7 : vector<8x256xf32>
    %c128 = arith.constant 128 : index
    %c0_6 = arith.constant 0 : index
    %9 = vector.load %arg2[%c128, %c0_6] : memref<384x256xbf16, #tpu.memory_space<vmem>>, vector<256x256xbf16>
    %c1 = arith.constant 1 : index
    %c0_7 = arith.constant 0 : index
    %10 = vector.load %arg3[%c1, %c0_7] : memref<8x256xf32, #tpu.memory_space<vmem>>, vector<1x256xf32>
    %11 = arith.truncf %8 : vector<8x256xf32> to vector<8x256xbf16>
    %cst_8 = arith.constant dense<0.000000e+00> : vector<8x256xf32>
    %12 = tpu.matmul %11, %9, %cst_8 {dimension_numbers = #tpu.dot_dimension_numbers<[1], [0], [0], [1], [0, 0, 1, 1], [], []>} : vector<8x256xbf16>, vector<256x256xbf16>, vector<8x256xf32> -> vector<8x256xf32>
    %13 = vector.broadcast %10 : vector<1x256xf32> to vector<8x256xf32>
    %14 = arith.addf %12, %13 : vector<8x256xf32>
    %cst_9 = arith.constant 0.000000e+00 : f32
    %15 = vector.broadcast %cst_9 : f32 to vector<8x256xf32>
    %16 = arith.maximumf %14, %15 : vector<8x256xf32>
    %c0_10 = arith.constant 0 : index
    %c128_11 = arith.constant 128 : index
    %17 = vector.load %arg0[%c0_10, %c128_11] : memref<8x384xf32, #tpu.memory_space<vmem>>, vector<8x256xf32>
    %18 = arith.addf %16, %17 : vector<8x256xf32>
    %c0_12 = arith.constant 0 : index
    %c0_13 = arith.constant 0 : index
    %19 = vector.load %arg1[%c0_12, %c0_13] : memref<640x128xbf16, #tpu.memory_space<vmem>>, vector<256x128xbf16>
    %c2 = arith.constant 2 : index
    %c0_14 = arith.constant 0 : index
    %20 = vector.load %arg3[%c2, %c0_14] : memref<8x256xf32, #tpu.memory_space<vmem>>, vector<1x128xf32>
    %21 = arith.truncf %18 : vector<8x256xf32> to vector<8x256xbf16>
    %cst_15 = arith.constant dense<0.000000e+00> : vector<8x128xf32>
    %22 = tpu.matmul %21, %19, %cst_15 {dimension_numbers = #tpu.dot_dimension_numbers<[1], [0], [0], [1], [0, 0, 1, 1], [], []>} : vector<8x256xbf16>, vector<256x128xbf16>, vector<8x128xf32> -> vector<8x128xf32>
    %23 = vector.broadcast %20 : vector<1x128xf32> to vector<8x128xf32>
    %24 = arith.addf %22, %23 : vector<8x128xf32>
    %cst_16 = arith.constant 0.000000e+00 : f32
    %25 = vector.broadcast %cst_16 : f32 to vector<8x128xf32>
    %26 = arith.maximumf %24, %25 : vector<8x128xf32>
    %c256 = arith.constant 256 : index
    %c0_17 = arith.constant 0 : index
    %27 = vector.load %arg1[%c256, %c0_17] : memref<640x128xbf16, #tpu.memory_space<vmem>>, vector<128x128xbf16>
    %c3 = arith.constant 3 : index
    %c0_18 = arith.constant 0 : index
    %28 = vector.load %arg3[%c3, %c0_18] : memref<8x256xf32, #tpu.memory_space<vmem>>, vector<1x128xf32>
    %29 = arith.truncf %26 : vector<8x128xf32> to vector<8x128xbf16>
    %cst_19 = arith.constant dense<0.000000e+00> : vector<8x128xf32>
    %30 = tpu.matmul %29, %27, %cst_19 {dimension_numbers = #tpu.dot_dimension_numbers<[1], [0], [0], [1], [0, 0, 1, 1], [], []>} : vector<8x128xbf16>, vector<128x128xbf16>, vector<8x128xf32> -> vector<8x128xf32>
    %31 = vector.broadcast %28 : vector<1x128xf32> to vector<8x128xf32>
    %32 = arith.addf %30, %31 : vector<8x128xf32>
    %cst_20 = arith.constant 0.000000e+00 : f32
    %33 = vector.broadcast %cst_20 : f32 to vector<8x128xf32>
    %34 = arith.maximumf %32, %33 : vector<8x128xf32>
    %c384 = arith.constant 384 : index
    %c0_21 = arith.constant 0 : index
    %35 = vector.load %arg1[%c384, %c0_21] : memref<640x128xbf16, #tpu.memory_space<vmem>>, vector<128x128xbf16>
    %c4 = arith.constant 4 : index
    %c0_22 = arith.constant 0 : index
    %36 = vector.load %arg3[%c4, %c0_22] : memref<8x256xf32, #tpu.memory_space<vmem>>, vector<1x128xf32>
    %37 = arith.truncf %34 : vector<8x128xf32> to vector<8x128xbf16>
    %cst_23 = arith.constant dense<0.000000e+00> : vector<8x128xf32>
    %38 = tpu.matmul %37, %35, %cst_23 {dimension_numbers = #tpu.dot_dimension_numbers<[1], [0], [0], [1], [0, 0, 1, 1], [], []>} : vector<8x128xbf16>, vector<128x128xbf16>, vector<8x128xf32> -> vector<8x128xf32>
    %39 = vector.broadcast %36 : vector<1x128xf32> to vector<8x128xf32>
    %40 = arith.addf %38, %39 : vector<8x128xf32>
    %cst_24 = arith.constant 0.000000e+00 : f32
    %41 = vector.broadcast %cst_24 : f32 to vector<8x128xf32>
    %42 = arith.maximumf %40, %41 : vector<8x128xf32>
    %c512 = arith.constant 512 : index
    %c0_25 = arith.constant 0 : index
    %43 = vector.load %arg1[%c512, %c0_25] : memref<640x128xbf16, #tpu.memory_space<vmem>>, vector<128x128xbf16>
    %c5 = arith.constant 5 : index
    %c0_26 = arith.constant 0 : index
    %44 = vector.load %arg3[%c5, %c0_26] : memref<8x256xf32, #tpu.memory_space<vmem>>, vector<1x128xf32>
    %45 = arith.truncf %42 : vector<8x128xf32> to vector<8x128xbf16>
    %cst_27 = arith.constant dense<0.000000e+00> : vector<8x128xf32>
    %46 = tpu.matmul %45, %43, %cst_27 {dimension_numbers = #tpu.dot_dimension_numbers<[1], [0], [0], [1], [0, 0, 1, 1], [], []>} : vector<8x128xbf16>, vector<128x128xbf16>, vector<8x128xf32> -> vector<8x128xf32>
    %47 = vector.broadcast %44 : vector<1x128xf32> to vector<8x128xf32>
    %48 = arith.addf %46, %47 : vector<8x128xf32>
    %c0_28 = arith.constant 0 : index
    %c0_29 = arith.constant 0 : index
    %49 = vector.load %arg4[%c0_28, %c0_29] : memref<8x128xf32, #tpu.memory_space<vmem>>, vector<8x128xf32>
    tpu.vector_store %arg4[%c0_28, %c0_29], %48 {strides = array<i32>} : memref<8x128xf32, #tpu.memory_space<vmem>>, vector<8x128xf32>,
    return
  }
}

</mosaic_0001>

<llo_original>
// kernel: forward.1
$region0: #{forward.1}
  #allocation0 [shape = 'u32[]', space=smem, size = 0x4, offset = 0x4, fixed_abs, tag = 'smem constant byte address 0x4 - core index']
  #allocation1 [shape = 'u32[144,128]{1,0:T(1,128)}', space=vmem, size = 0x12000, scoped, tag = 'internal scratch']
  %s0 = inlined_call_operand.vmem [shape: f32[8,384], index: 0, kind: input, shape index: {}]
  %s1 = inlined_call_operand.hbm [shape: bf16[640,128], index: 1, kind: input, shape index: {}]
  %s2 = inlined_call_operand.hbm [shape: bf16[384,256], index: 2, kind: input, shape index: {}]
  %s3 = inlined_call_operand.vmem [shape: f32[8,256], index: 3, kind: input, shape index: {}]
  %s4 = inlined_call_operand.vmem [shape: f32[8,128], index: 4, kind: output, shape index: {}]
  %s5 = sld [smem:[#allocation0]]
  $region34: #{forward.1} parent=0
    _
  %s7 = ssub.s32 1, %s5
  %s8 = scalar_select 0, %s7, %s5
  $region1: #{forward.1} parent=0
    #allocation2 [shape = 'u8[163840]{0}', space=vmem, size = 0x28000, scoped, tag = 'input window, operand 1, single buffered']
    #allocation3 [shape = 's32[1]{0}', space=sflag, size = 0x4, scoped, tag = 'scoped memory for forward.1']
    #allocation4 [shape = 'u8[196608]{0}', space=vmem, size = 0x30000, scoped, tag = 'input window, operand 2, single buffered']
    #allocation5 [shape = 's32[1]{0}', space=sflag, size = 0x4, scoped, tag = 'scoped memory for forward.1']
    %9 = vsyncpa [#allocation3], 0
    %10 = vsyncpa [#allocation5], 0
    // Predicated region
    $region2: #{forward.1} parent=1 // pred_check
      _
    $region3: #{forward.1} parent=1 // pred_check_branch
      %12 = sbr.rel (0) target = $region5
    $region4: #{forward.1} parent=1 // pred_region
      _
    $region5: #{forward.1} parent=1 // pred_fallthru
      _
    // Predicated region
    $region6: #{forward.1} parent=1 // pred_check
      _
    $region7: #{forward.1} parent=1 // pred_check_branch
      %14 = sbr.rel (0) target = $region9
    $region8: #{forward.1} parent=1 // pred_region
      %s16 = ssub.s32 5120, 5120
      %17 = vsyncadd [#allocation3], %s16
      %s18 = sshll.u32 [#allocation2], 4
      %s19 = int_to_ptr.vmem [resolvable:$true] %s18
      %24 = dma.hbm_to_vmem [thread:$0]  %s1, 5120, %s19, [#allocation3], 64, 64, 4
    $region9: #{forward.1} parent=1 // pred_fallthru
      _
    // Predicated region
    $region10: #{forward.1} parent=1 // pred_check
      _
    $region11: #{forward.1} parent=1 // pred_check_branch
      %26 = sbr.rel (0) target = $region13
    $region12: #{forward.1} parent=1 // pred_region
      %s28 = ssub.s32 6144, 6144
      %29 = vsyncadd [#allocation5], %s28
      %s30 = sshll.u32 [#allocation4], 4
      %s31 = int_to_ptr.vmem [resolvable:$true] %s30
      %36 = dma.hbm_to_vmem [thread:$0]  %s2, 6144, %s31, [#allocation5], 128, 128, 8
    $region13: #{forward.1} parent=1 // pred_fallthru
      _
    // Predicated region
    $region14: #{forward.1} parent=1 // pred_check
      _
    $region15: #{forward.1} parent=1 // pred_check_branch
      %38 = sbr.rel (0) target = $region17
    $region16: #{forward.1} parent=1 // pred_region
      _
    $region17: #{forward.1} parent=1 // pred_fallthru
      _
    // Predicated region
    $region18: #{forward.1} parent=1 // pred_check
      _
    $region19: #{forward.1} parent=1 // pred_check_branch
      %40 = sbr.rel (0) target = $region21
    $region20: #{forward.1} parent=1 // pred_region
      %41 = dma.done [#allocation3], 5120
    $region21: #{forward.1} parent=1 // pred_fallthru
      _
    // Predicated region
    $region22: #{forward.1} parent=1 // pred_check
      _
    $region23: #{forward.1} parent=1 // pred_check_branch
      %43 = sbr.rel (0) target = $region25
    $region24: #{forward.1} parent=1 // pred_region
      %44 = dma.done [#allocation5], 6144
    $region25: #{forward.1} parent=1 // pred_fallthru
      _
    %v46 = vld [vmem:[%s0] sm:$0xff]
    %v47 = vld [vmem:[#allocation4] sm:$0xff]
    %v48 = vld [vmem:[#allocation4 + $0x8] sm:$0xff]
    %v49 = vld [vmem:[#allocation4 + $0x10] sm:$0xff]
    %v50 = vld [vmem:[#allocation4 + $0x18] sm:$0xff]
    %v51 = vld [vmem:[#allocation4 + $0x20] sm:$0xff]
    %v52 = vld [vmem:[#allocation4 + $0x28] sm:$0xff]
    %v53 = vld [vmem:[#allocation4 + $0x30] sm:$0xff]
    %v54 = vld [vmem:[#allocation4 + $0x38] sm:$0xff]
    %v55 = vld [vmem:[#allocation4 + $0x40] sm:$0xff]
    %v56 = vld [vmem:[#allocation4 + $0x48] sm:$0xff]
    %v57 = vld [vmem:[#allocation4 + $0x50] sm:$0xff]
    %v58 = vld [vmem:[#allocation4 + $0x58] sm:$0xff]
    %v59 = vld [vmem:[#allocation4 + $0x60] sm:$0xff]
    %v60 = vld [vmem:[#allocation4 + $0x68] sm:$0xff]
    %v61 = vld [vmem:[#allocation4 + $0x70] sm:$0xff]
    %v62 = vld [vmem:[#allocation4 + $0x78] sm:$0xff]
    %v63 = vld [vmem:[%s3] ss:$8 sm:$0x3]
    %v64 = vpack.c.bf16 %v46, %v46
    %v66 = vlaneseq
    %v67 = vshrl.u32 %v66, 7
    %v68 = vsub.s32 0, %v67
    %v69 = vrot.slane %v63, %v68
    %v70 = vlaneseq
    %v71 = vshrl.u32 %v70, 7
    %v72 = vsub.s32 1, %v71
    %v73 = vrot.slane %v63, %v72
    %v92 = vunpack.c.l.b16 %v47
    %v93 = vunpack.c.h.b16 %v47
    %v94 = vunpack.c.l.b16 %v48
    %v95 = vunpack.c.h.b16 %v48
    %v96 = vunpack.c.l.b16 %v49
    %v97 = vunpack.c.h.b16 %v49
    %v98 = vunpack.c.l.b16 %v50
    %v99 = vunpack.c.h.b16 %v50
    %v100 = vunpack.c.l.b16 %v51
    %v101 = vunpack.c.h.b16 %v51
    %v102 = vunpack.c.l.b16 %v52
    %v103 = vunpack.c.h.b16 %v52
    %v104 = vunpack.c.l.b16 %v53
    %v105 = vunpack.c.h.b16 %v53
    %v106 = vunpack.c.l.b16 %v54
    %v107 = vunpack.c.h.b16 %v54
    %v108 = vunpack.c.l.b16 %v55
    %v109 = vunpack.c.h.b16 %v55
    %v110 = vunpack.c.l.b16 %v56
    %v111 = vunpack.c.h.b16 %v56
    %v112 = vunpack.c.l.b16 %v57
    %v113 = vunpack.c.h.b16 %v57
    %v114 = vunpack.c.l.b16 %v58
    %v115 = vunpack.c.h.b16 %v58
    %v116 = vunpack.c.l.b16 %v59
    %v117 = vunpack.c.h.b16 %v59
    %v118 = vunpack.c.l.b16 %v60
    %v119 = vunpack.c.h.b16 %v60
    %v120 = vunpack.c.l.b16 %v61
    %v121 = vunpack.c.h.b16 %v61
    %v122 = vunpack.c.l.b16 %v62
    %v123 = vunpack.c.h.b16 %v62
    %v124 = vpack.c.b16 %v94, %v92
    %v125 = vpack.c.b16 %v95, %v93
    %v126 = vpack.c.b16 %v98, %v96
    %v127 = vpack.c.b16 %v99, %v97
    %v128 = vpack.c.b16 %v102, %v100
    %v129 = vpack.c.b16 %v103, %v101
    %v130 = vpack.c.b16 %v106, %v104
    %v131 = vpack.c.b16 %v107, %v105
    %v132 = vpack.c.b16 %v110, %v108
    %v133 = vpack.c.b16 %v111, %v109
    %v134 = vpack.c.b16 %v114, %v112
    %v135 = vpack.c.b16 %v115, %v113
    %v136 = vpack.c.b16 %v118, %v116
    %v137 = vpack.c.b16 %v119, %v117
    %v138 = vpack.c.b16 %v122, %v120
    %v139 = vpack.c.b16 %v123, %v121
    %156 = vmatprep.subr.bf16.mxu0 %v139
    %157 = vmatpush1.bf16.msra.mxu0 %v138
    %158 = vmatprep.subr.bf16.mxu0 %v137
    %159 = vmatpush1.bf16.msra.mxu0 %v136
    %160 = vmatprep.subr.bf16.mxu0 %v135
    %161 = vmatpush1.bf16.msra.mxu0 %v134
    %162 = vmatprep.subr.bf16.mxu0 %v133
    %163 = vmatpush1.bf16.msra.mxu0 %v132
    %164 = vmatprep.subr.bf16.mxu0 %v131
    %165 = vmatpush1.bf16.msra.mxu0 %v130
    %166 = vmatprep.subr.bf16.mxu0 %v129
    %167 = vmatpush1.bf16.msra.mxu0 %v128
    %168 = vmatprep.subr.bf16.mxu0 %v127
    %169 = vmatpush1.bf16.msra.mxu0 %v126
    %170 = vmatprep.subr.bf16.mxu0 %v125
    %171 = vmatpush1.bf16.msra.mxu0 %v124
    %172 = vmatprep.subr.bf16.mxu0 0
    %173 = vmatpush2.bf16.msra.mxu0 0
    %174 = vmatprep.subr.bf16.mxu0 0
    %175 = vmatpush2.bf16.msra.mxu0 0
    %176 = vmatprep.subr.bf16.mxu0 0
    %177 = vmatpush2.bf16.msra.mxu0 0
    %178 = vmatprep.subr.bf16.mxu0 0
    %179 = vmatpush2.bf16.msra.mxu0 0
    %180 = vmatprep.subr.bf16.mxu0 0
    %181 = vmatpush2.bf16.msra.mxu0 0
    %182 = vmatprep.subr.bf16.mxu0 0
    %183 = vmatpush2.bf16.msra.mxu0 0
    %184 = vmatprep.subr.bf16.mxu0 0
    %185 = vmatpush2.bf16.msra.mxu0 0
    %186 = vmatprep.subr.bf16.mxu0 0
    %187 = vmatpush2.bf16.msra.mxu0 0
    %188 = vmatprep.mubr.bf16.mxu0 0
    %189 = vmatmul.mubr.bf16.gmra.mxu0 %v64
    %v190 = vpop.f32.mrf.mxu0
    %v191 = vadd.f32 %v69, %v190
    %v192 = vpop.f32.mrf.mxu0
    %v193 = vadd.f32 %v73, %v192
    %v194 = vpop.f32.mrf.mxu0
    %v195 = vpop.f32.mrf.mxu0
    %196 = vdwg.mxu0
    %v197 = vmax.f32 %v191, 0.0
    %v198 = vmax.f32 %v193, 0.0
    %v199 = vld [vmem:[#allocation4 + $0x80] sm:$0xff]
    %v200 = vld [vmem:[#allocation4 + $0x88] sm:$0xff]
    %v201 = vld [vmem:[#allocation4 + $0x90] sm:$0xff]
    %v202 = vld [vmem:[#allocation4 + $0x98] sm:$0xff]
    %v203 = vld [vmem:[#allocation4 + $0xa0] sm:$0xff]
    %v204 = vld [vmem:[#allocation4 + $0xa8] sm:$0xff]
    %v205 = vld [vmem:[#allocation4 + $0xb0] sm:$0xff]
    %v206 = vld [vmem:[#allocation4 + $0xb8] sm:$0xff]
    %v207 = vld [vmem:[#allocation4 + $0xc0] sm:$0xff]
    %v208 = vld [vmem:[#allocation4 + $0xc8] sm:$0xff]
    %v209 = vld [vmem:[#allocation4 + $0xd0] sm:$0xff]
    %v210 = vld [vmem:[#allocation4 + $0xd8] sm:$0xff]
    %v211 = vld [vmem:[#allocation4 + $0xe0] sm:$0xff]
    %v212 = vld [vmem:[#allocation4 + $0xe8] sm:$0xff]
    %v213 = vld [vmem:[#allocation4 + $0xf0] sm:$0xff]
    %v214 = vld [vmem:[#allocation4 + $0xf8] sm:$0xff]
    %v215 = vld [vmem:[#allocation4 + $0x100] sm:$0xff]
    %v216 = vld [vmem:[#allocation4 + $0x108] sm:$0xff]
    %v217 = vld [vmem:[#allocation4 + $0x110] sm:$0xff]
    %v218 = vld [vmem:[#allocation4 + $0x118] sm:$0xff]
    %v219 = vld [vmem:[#allocation4 + $0x120] sm:$0xff]
    %v220 = vld [vmem:[#allocation4 + $0x128] sm:$0xff]
    %v221 = vld [vmem:[#allocation4 + $0x130] sm:$0xff]
    %v222 = vld [vmem:[#allocation4 + $0x138] sm:$0xff]
    %v223 = vld [vmem:[#allocation4 + $0x140] sm:$0xff]
    %v224 = vld [vmem:[#allocation4 + $0x148] sm:$0xff]
    %v225 = vld [vmem:[#allocation4 + $0x150] sm:$0xff]
    %v226 = vld [vmem:[#allocation4 + $0x158] sm:$0xff]
    %v227 = vld [vmem:[#allocation4 + $0x160] sm:$0xff]
    %v228 = vld [vmem:[#allocation4 + $0x168] sm:$0xff]
    %v229 = vld [vmem:[#allocation4 + $0x170] sm:$0xff]
    %v230 = vld [vmem:[#allocation4 + $0x178] sm:$0xff]
    %s231 = scalar_lea.vmem %s3, 1
    %v232 = vld [vmem:[%s231] ss:$8 sm:$0x3]
    %v233 = vpack.c.bf16 %v197, %v197
    %v234 = vpack.c.bf16 %v198, %v198
    %v236 = vlaneseq
    %v237 = vshrl.u32 %v236, 7
    %v238 = vsub.s32 0, %v237
    %v239 = vrot.slane %v232, %v238
    %v240 = vlaneseq
    %v241 = vshrl.u32 %v240, 7
    %v242 = vsub.s32 1, %v241
    %v243 = vrot.slane %v232, %v242
    %v278 = vunpack.c.l.b16 %v199
    %v279 = vunpack.c.h.b16 %v199
    %v280 = vunpack.c.l.b16 %v200
    %v281 = vunpack.c.h.b16 %v200
    %v282 = vunpack.c.l.b16 %v201
    %v283 = vunpack.c.h.b16 %v201
    %v284 = vunpack.c.l.b16 %v202
    %v285 = vunpack.c.h.b16 %v202
    %v286 = vunpack.c.l.b16 %v203
    %v287 = vunpack.c.h.b16 %v203
    %v288 = vunpack.c.l.b16 %v204
    %v289 = vunpack.c.h.b16 %v204
    %v290 = vunpack.c.l.b16 %v205
    %v291 = vunpack.c.h.b16 %v205
    %v292 = vunpack.c.l.b16 %v206
    %v293 = vunpack.c.h.b16 %v206
    %v294 = vunpack.c.l.b16 %v207
    %v295 = vunpack.c.h.b16 %v207
    %v296 = vunpack.c.l.b16 %v208
    %v297 = vunpack.c.h.b16 %v208
    %v298 = vunpack.c.l.b16 %v209
    %v299 = vunpack.c.h.b16 %v209
    %v300 = vunpack.c.l.b16 %v210
    %v301 = vunpack.c.h.b16 %v210
    %v302 = vunpack.c.l.b16 %v211
    %v303 = vunpack.c.h.b16 %v211
    %v304 = vunpack.c.l.b16 %v212
    %v305 = vunpack.c.h.b16 %v212
    %v306 = vunpack.c.l.b16 %v213
    %v307 = vunpack.c.h.b16 %v213
    %v308 = vunpack.c.l.b16 %v214
    %v309 = vunpack.c.h.b16 %v214
    %v310 = vunpack.c.l.b16 %v215
    %v311 = vunpack.c.h.b16 %v215
    %v312 = vunpack.c.l.b16 %v216
    %v313 = vunpack.c.h.b16 %v216
    %v314 = vunpack.c.l.b16 %v217
    %v315 = vunpack.c.h.b16 %v217
    %v316 = vunpack.c.l.b16 %v218
    %v317 = vunpack.c.h.b16 %v218
    %v318 = vunpack.c.l.b16 %v219
    %v319 = vunpack.c.h.b16 %v219
    %v320 = vunpack.c.l.b16 %v220
    %v321 = vunpack.c.h.b16 %v220
    %v322 = vunpack.c.l.b16 %v221
    %v323 = vunpack.c.h.b16 %v221
    %v324 = vunpack.c.l.b16 %v222
    %v325 = vunpack.c.h.b16 %v222
    %v326 = vunpack.c.l.b16 %v223
    %v327 = vunpack.c.h.b16 %v223
    %v328 = vunpack.c.l.b16 %v224
    %v329 = vunpack.c.h.b16 %v224
    %v330 = vunpack.c.l.b16 %v225
    %v331 = vunpack.c.h.b16 %v225
    %v332 = vunpack.c.l.b16 %v226
    %v333 = vunpack.c.h.b16 %v226
    %v334 = vunpack.c.l.b16 %v227
    %v335 = vunpack.c.h.b16 %v227
    %v336 = vunpack.c.l.b16 %v228
    %v337 = vunpack.c.h.b16 %v228
    %v338 = vunpack.c.l.b16 %v229
    %v339 = vunpack.c.h.b16 %v229
    %v340 = vunpack.c.l.b16 %v230
    %v341 = vunpack.c.h.b16 %v230
    %v342 = vpack.c.b16 %v280, %v278
    %v343 = vpack.c.b16 %v281, %v279
    %v344 = vpack.c.b16 %v284, %v282
    %v345 = vpack.c.b16 %v285, %v283
    %v346 = vpack.c.b16 %v288, %v286
    %v347 = vpack.c.b16 %v289, %v287
    %v348 = vpack.c.b16 %v292, %v290
    %v349 = vpack.c.b16 %v293, %v291
    %v350 = vpack.c.b16 %v296, %v294
    %v351 = vpack.c.b16 %v297, %v295
    %v352 = vpack.c.b16 %v300, %v298
    %v353 = vpack.c.b16 %v301, %v299
    %v354 = vpack.c.b16 %v304, %v302
    %v355 = vpack.c.b16 %v305, %v303
    %v356 = vpack.c.b16 %v308, %v306
    %v357 = vpack.c.b16 %v309, %v307
    %v358 = vpack.c.b16 %v312, %v310
    %v359 = vpack.c.b16 %v313, %v311
    %v360 = vpack.c.b16 %v316, %v314
    %v361 = vpack.c.b16 %v317, %v315
    %v362 = vpack.c.b16 %v320, %v318
    %v363 = vpack.c.b16 %v321, %v319
    %v364 = vpack.c.b16 %v324, %v322
    %v365 = vpack.c.b16 %v325, %v323
    %v366 = vpack.c.b16 %v328, %v326
    %v367 = vpack.c.b16 %v329, %v327
    %v368 = vpack.c.b16 %v332, %v330
    %v369 = vpack.c.b16 %v333, %v331
    %v370 = vpack.c.b16 %v336, %v334
    %v371 = vpack.c.b16 %v337, %v335
    %v372 = vpack.c.b16 %v340, %v338
    %v373 = vpack.c.b16 %v341, %v339
    %406 = vmatprep.subr.bf16.mxu0 %v357
    %407 = vmatpush1.bf16.msra.mxu0 %v356
    %408 = vmatprep.subr.bf16.mxu0 %v355
    %409 = vmatpush1.bf16.msra.mxu0 %v354
    %410 = vmatprep.subr.bf16.mxu0 %v353
    %411 = vmatpush1.bf16.msra.mxu0 %v352
    %412 = vmatprep.subr.bf16.mxu0 %v351
    %413 = vmatpush1.bf16.msra.mxu0 %v350
    %414 = vmatprep.subr.bf16.mxu0 %v349
    %415 = vmatpush1.bf16.msra.mxu0 %v348
    %416 = vmatprep.subr.bf16.mxu0 %v347
    %417 = vmatpush1.bf16.msra.mxu0 %v346
    %418 = vmatprep.subr.bf16.mxu0 %v345
    %419 = vmatpush1.bf16.msra.mxu0 %v344
    %420 = vmatprep.subr.bf16.mxu0 %v343
    %421 = vmatpush1.bf16.msra.mxu0 %v342
    %422 = vmatprep.subr.bf16.mxu0 %v373
    %423 = vmatpush2.bf16.msra.mxu0 %v372
    %424 = vmatprep.subr.bf16.mxu0 %v371
    %425 = vmatpush2.bf16.msra.mxu0 %v370
    %426 = vmatprep.subr.bf16.mxu0 %v369
    %427 = vmatpush2.bf16.msra.mxu0 %v368
    %428 = vmatprep.subr.bf16.mxu0 %v367
    %429 = vmatpush2.bf16.msra.mxu0 %v366
    %430 = vmatprep.subr.bf16.mxu0 %v365
    %431 = vmatpush2.bf16.msra.mxu0 %v364
    %432 = vmatprep.subr.bf16.mxu0 %v363
    %433 = vmatpush2.bf16.msra.mxu0 %v362
    %434 = vmatprep.subr.bf16.mxu0 %v361
    %435 = vmatpush2.bf16.msra.mxu0 %v360
    %436 = vmatprep.subr.bf16.mxu0 %v359
    %437 = vmatpush2.bf16.msra.mxu0 %v358
    %438 = vmatprep.mubr.bf16.mxu0 %v234
    %439 = vmatmul.mubr.bf16.gmra.mxu0 %v233
    %v440 = vpop.f32.mrf.mxu0
    %v441 = vadd.f32 %v239, %v440
    %v442 = vpop.f32.mrf.mxu0
    %v443 = vadd.f32 %v243, %v442
    %v444 = vpop.f32.mrf.mxu0
    %v445 = vpop.f32.mrf.mxu0
    %446 = vdwg.mxu0
    %v447 = vmax.f32 %v441, 0.0
    %v448 = vmax.f32 %v443, 0.0
    %v449 = vld [vmem:[%s0 + $0x8] sm:$0xff]
    %v450 = vld [vmem:[%s0 + $0x10] sm:$0xff]
    %v451 = vadd.f32 %v447, %v449
    %v452 = vadd.f32 %v448, %v450
    %v453 = vld [vmem:[#allocation2] sm:$0xf]
    %v454 = vld [vmem:[#allocation2 + $0x4] sm:$0xf]
    %v455 = vld [vmem:[#allocation2 + $0x8] sm:$0xf]
    %v456 = vld [vmem:[#allocation2 + $0xc] sm:$0xf]
    %v457 = vld [vmem:[#allocation2 + $0x10] sm:$0xf]
    %v458 = vld [vmem:[#allocation2 + $0x14] sm:$0xf]
    %v459 = vld [vmem:[#allocation2 + $0x18] sm:$0xf]
    %v460 = vld [vmem:[#allocation2 + $0x1c] sm:$0xf]
    %v461 = vld [vmem:[#allocation2 + $0x20] sm:$0xf]
    %v462 = vld [vmem:[#allocation2 + $0x24] sm:$0xf]
    %v463 = vld [vmem:[#allocation2 + $0x28] sm:$0xf]
    %v464 = vld [vmem:[#allocation2 + $0x2c] sm:$0xf]
    %v465 = vld [vmem:[#allocation2 + $0x30] sm:$0xf]
    %v466 = vld [vmem:[#allocation2 + $0x34] sm:$0xf]
    %v467 = vld [vmem:[#allocation2 + $0x38] sm:$0xf]
    %v468 = vld [vmem:[#allocation2 + $0x3c] sm:$0xf]
    %v469 = vld [vmem:[#allocation2 + $0x40] sm:$0xf]
    %v470 = vld [vmem:[#allocation2 + $0x44] sm:$0xf]
    %v471 = vld [vmem:[#allocation2 + $0x48] sm:$0xf]
    %v472 = vld [vmem:[#allocation2 + $0x4c] sm:$0xf]
    %v473 = vld [vmem:[#allocation2 + $0x50] sm:$0xf]
    %v474 = vld [vmem:[#allocation2 + $0x54] sm:$0xf]
    %v475 = vld [vmem:[#allocation2 + $0x58] sm:$0xf]
    %v476 = vld [vmem:[#allocation2 + $0x5c] sm:$0xf]
    %v477 = vld [vmem:[#allocation2 + $0x60] sm:$0xf]
    %v478 = vld [vmem:[#allocation2 + $0x64] sm:$0xf]
    %v479 = vld [vmem:[#allocation2 + $0x68] sm:$0xf]
    %v480 = vld [vmem:[#allocation2 + $0x6c] sm:$0xf]
    %v481 = vld [vmem:[#allocation2 + $0x70] sm:$0xf]
    %v482 = vld [vmem:[#allocation2 + $0x74] sm:$0xf]
    %v483 = vld [vmem:[#allocation2 + $0x78] sm:$0xf]
    %v484 = vld [vmem:[#allocation2 + $0x7c] sm:$0xf]
    %v485 = vld [vmem:[%s3 + $0x2] ss:$0 sm:$0xff]
    %v486 = vpack.c.bf16 %v451, %v451
    %v487 = vpack.c.bf16 %v452, %v452
    %v520 = vunpack.c.l.b16 %v453
    %v521 = vunpack.c.l.b16 %v454
    %v522 = vunpack.c.l.b16 %v455
    %v523 = vunpack.c.l.b16 %v456
    %v524 = vunpack.c.l.b16 %v457
    %v525 = vunpack.c.l.b16 %v458
    %v526 = vunpack.c.l.b16 %v459
    %v527 = vunpack.c.l.b16 %v460
    %v528 = vunpack.c.l.b16 %v461
    %v529 = vunpack.c.l.b16 %v462
    %v530 = vunpack.c.l.b16 %v463
    %v531 = vunpack.c.l.b16 %v464
    %v532 = vunpack.c.l.b16 %v465
    %v533 = vunpack.c.l.b16 %v466
    %v534 = vunpack.c.l.b16 %v467
    %v535 = vunpack.c.l.b16 %v468
    %v536 = vunpack.c.l.b16 %v469
    %v537 = vunpack.c.l.b16 %v470
    %v538 = vunpack.c.l.b16 %v471
    %v539 = vunpack.c.l.b16 %v472
    %v540 = vunpack.c.l.b16 %v473
    %v541 = vunpack.c.l.b16 %v474
    %v542 = vunpack.c.l.b16 %v475
    %v543 = vunpack.c.l.b16 %v476
    %v544 = vunpack.c.l.b16 %v477
    %v545 = vunpack.c.l.b16 %v478
    %v546 = vunpack.c.l.b16 %v479
    %v547 = vunpack.c.l.b16 %v480
    %v548 = vunpack.c.l.b16 %v481
    %v549 = vunpack.c.l.b16 %v482
    %v550 = vunpack.c.l.b16 %v483
    %v551 = vunpack.c.l.b16 %v484
    %v552 = vpack.c.b16 %v521, %v520
    %v553 = vpack.c.b16 %v523, %v522
    %v554 = vpack.c.b16 %v525, %v524
    %v555 = vpack.c.b16 %v527, %v526
    %v556 = vpack.c.b16 %v529, %v528
    %v557 = vpack.c.b16 %v531, %v530
    %v558 = vpack.c.b16 %v533, %v532
    %v559 = vpack.c.b16 %v535, %v534
    %v560 = vpack.c.b16 %v537, %v536
    %v561 = vpack.c.b16 %v539, %v538
    %v562 = vpack.c.b16 %v541, %v540
    %v563 = vpack.c.b16 %v543, %v542
    %v564 = vpack.c.b16 %v545, %v544
    %v565 = vpack.c.b16 %v547, %v546
    %v566 = vpack.c.b16 %v549, %v548
    %v567 = vpack.c.b16 %v551, %v550
    %584 = vmatprep.subr.bf16.mxu0 0
    %585 = vmatpush1.bf16.msra.mxu0 %v559
    %586 = vmatprep.subr.bf16.mxu0 0
    %587 = vmatpush1.bf16.msra.mxu0 %v558
    %588 = vmatprep.subr.bf16.mxu0 0
    %589 = vmatpush1.bf16.msra.mxu0 %v557
    %590 = vmatprep.subr.bf16.mxu0 0
    %591 = vmatpush1.bf16.msra.mxu0 %v556
    %592 = vmatprep.subr.bf16.mxu0 0
    %593 = vmatpush1.bf16.msra.mxu0 %v555
    %594 = vmatprep.subr.bf16.mxu0 0
    %595 = vmatpush1.bf16.msra.mxu0 %v554
    %596 = vmatprep.subr.bf16.mxu0 0
    %597 = vmatpush1.bf16.msra.mxu0 %v553
    %598 = vmatprep.subr.bf16.mxu0 0
    %599 = vmatpush1.bf16.msra.mxu0 %v552
    %600 = vmatprep.subr.bf16.mxu0 0
    %601 = vmatpush2.bf16.msra.mxu0 %v567
    %602 = vmatprep.subr.bf16.mxu0 0
    %603 = vmatpush2.bf16.msra.mxu0 %v566
    %604 = vmatprep.subr.bf16.mxu0 0
    %605 = vmatpush2.bf16.msra.mxu0 %v565
    %606 = vmatprep.subr.bf16.mxu0 0
    %607 = vmatpush2.bf16.msra.mxu0 %v564
    %608 = vmatprep.subr.bf16.mxu0 0
    %609 = vmatpush2.bf16.msra.mxu0 %v563
    %610 = vmatprep.subr.bf16.mxu0 0
    %611 = vmatpush2.bf16.msra.mxu0 %v562
    %612 = vmatprep.subr.bf16.mxu0 0
    %613 = vmatpush2.bf16.msra.mxu0 %v561
    %614 = vmatprep.subr.bf16.mxu0 0
    %615 = vmatpush2.bf16.msra.mxu0 %v560
    %616 = vmatprep.mubr.bf16.mxu0 %v487
    %617 = vmatmul.mubr.bf16.gmra.mxu0 %v486
    %v618 = vpop.f32.mrf.mxu0
    %v619 = vadd.f32 %v485, %v618
    %v620 = vpop.f32.mrf.mxu0
    %v621 = vpop.f32.mrf.mxu0
    %v622 = vpop.f32.mrf.mxu0
    %623 = vdwg.mxu0
    %v624 = vmax.f32 %v619, 0.0
    %v625 = vld [vmem:[#allocation2 + $0x80] sm:$0xf]
    %v626 = vld [vmem:[#allocation2 + $0x84] sm:$0xf]
    %v627 = vld [vmem:[#allocation2 + $0x88] sm:$0xf]
    %v628 = vld [vmem:[#allocation2 + $0x8c] sm:$0xf]
    %v629 = vld [vmem:[#allocation2 + $0x90] sm:$0xf]
    %v630 = vld [vmem:[#allocation2 + $0x94] sm:$0xf]
    %v631 = vld [vmem:[#allocation2 + $0x98] sm:$0xf]
    %v632 = vld [vmem:[#allocation2 + $0x9c] sm:$0xf]
    %v633 = vld [vmem:[#allocation2 + $0xa0] sm:$0xf]
    %v634 = vld [vmem:[#allocation2 + $0xa4] sm:$0xf]
    %v635 = vld [vmem:[#allocation2 + $0xa8] sm:$0xf]
    %v636 = vld [vmem:[#allocation2 + $0xac] sm:$0xf]
    %v637 = vld [vmem:[#allocation2 + $0xb0] sm:$0xf]
    %v638 = vld [vmem:[#allocation2 + $0xb4] sm:$0xf]
    %v639 = vld [vmem:[#allocation2 + $0xb8] sm:$0xf]
    %v640 = vld [vmem:[#allocation2 + $0xbc] sm:$0xf]
    %v641 = vld [vmem:[%s3 + $0x3] ss:$0 sm:$0xff]
    %v642 = vpack.c.bf16 %v624, %v624
    %v659 = vunpack.c.l.b16 %v625
    %v660 = vunpack.c.l.b16 %v626
    %v661 = vunpack.c.l.b16 %v627
    %v662 = vunpack.c.l.b16 %v628
    %v663 = vunpack.c.l.b16 %v629
    %v664 = vunpack.c.l.b16 %v630
    %v665 = vunpack.c.l.b16 %v631
    %v666 = vunpack.c.l.b16 %v632
    %v667 = vunpack.c.l.b16 %v633
    %v668 = vunpack.c.l.b16 %v634
    %v669 = vunpack.c.l.b16 %v635
    %v670 = vunpack.c.l.b16 %v636
    %v671 = vunpack.c.l.b16 %v637
    %v672 = vunpack.c.l.b16 %v638
    %v673 = vunpack.c.l.b16 %v639
    %v674 = vunpack.c.l.b16 %v640
    %v675 = vpack.c.b16 %v660, %v659
    %v676 = vpack.c.b16 %v662, %v661
    %v677 = vpack.c.b16 %v664, %v663
    %v678 = vpack.c.b16 %v666, %v665
    %v679 = vpack.c.b16 %v668, %v667
    %v680 = vpack.c.b16 %v670, %v669
    %v681 = vpack.c.b16 %v672, %v671
    %v682 = vpack.c.b16 %v674, %v673
    %691 = vmatprep.subr.bf16.mxu0 0
    %692 = vmatpush1.bf16.msra.mxu0 %v682
    %693 = vmatprep.subr.bf16.mxu0 0
    %694 = vmatpush1.bf16.msra.mxu0 %v681
    %695 = vmatprep.subr.bf16.mxu0 0
    %696 = vmatpush1.bf16.msra.mxu0 %v680
    %697 = vmatprep.subr.bf16.mxu0 0
    %698 = vmatpush1.bf16.msra.mxu0 %v679
    %699 = vmatprep.subr.bf16.mxu0 0
    %700 = vmatpush1.bf16.msra.mxu0 %v678
    %701 = vmatprep.subr.bf16.mxu0 0
    %702 = vmatpush1.bf16.msra.mxu0 %v677
    %703 = vmatprep.subr.bf16.mxu0 0
    %704 = vmatpush1.bf16.msra.mxu0 %v676
    %705 = vmatprep.subr.bf16.mxu0 0
    %706 = vmatpush1.bf16.msra.mxu0 %v675
    %707 = vmatprep.subr.bf16.mxu0 0
    %708 = vmatpush2.bf16.msra.mxu0 0
    %709 = vmatprep.subr.bf16.mxu0 0
    %710 = vmatpush2.bf16.msra.mxu0 0
    %711 = vmatprep.subr.bf16.mxu0 0
    %712 = vmatpush2.bf16.msra.mxu0 0
    %713 = vmatprep.subr.bf16.mxu0 0
    %714 = vmatpush2.bf16.msra.mxu0 0
    %715 = vmatprep.subr.bf16.mxu0 0
    %716 = vmatpush2.bf16.msra.mxu0 0
    %717 = vmatprep.subr.bf16.mxu0 0
    %718 = vmatpush2.bf16.msra.mxu0 0
    %719 = vmatprep.subr.bf16.mxu0 0
    %720 = vmatpush2.bf16.msra.mxu0 0
    %721 = vmatprep.subr.bf16.mxu0 0
    %722 = vmatpush2.bf16.msra.mxu0 0
    %723 = vmatprep.mubr.bf16.mxu0 0
    %724 = vmatmul.mubr.bf16.gmra.mxu0 %v642
    %v725 = vpop.f32.mrf.mxu0
    %v726 = vadd.f32 %v641, %v725
    %v727 = vpop.f32.mrf.mxu0
    %v728 = vpop.f32.mrf.mxu0
    %v729 = vpop.f32.mrf.mxu0
    %730 = vdwg.mxu0
    %v731 = vmax.f32 %v726, 0.0
    %v732 = vld [vmem:[#allocation2 + $0xc0] sm:$0xf]
    %v733 = vld [vmem:[#allocation2 + $0xc4] sm:$0xf]
    %v734 = vld [vmem:[#allocation2 + $0xc8] sm:$0xf]
    %v735 = vld [vmem:[#allocation2 + $0xcc] sm:$0xf]
    %v736 = vld [vmem:[#allocation2 + $0xd0] sm:$0xf]
    %v737 = vld [vmem:[#allocation2 + $0xd4] sm:$0xf]
    %v738 = vld [vmem:[#allocation2 + $0xd8] sm:$0xf]
    %v739 = vld [vmem:[#allocation2 + $0xdc] sm:$0xf]
    %v740 = vld [vmem:[#allocation2 + $0xe0] sm:$0xf]
    %v741 = vld [vmem:[#allocation2 + $0xe4] sm:$0xf]
    %v742 = vld [vmem:[#allocation2 + $0xe8] sm:$0xf]
    %v743 = vld [vmem:[#allocation2 + $0xec] sm:$0xf]
    %v744 = vld [vmem:[#allocation2 + $0xf0] sm:$0xf]
    %v745 = vld [vmem:[#allocation2 + $0xf4] sm:$0xf]
    %v746 = vld [vmem:[#allocation2 + $0xf8] sm:$0xf]
    %v747 = vld [vmem:[#allocation2 + $0xfc] sm:$0xf]
    %v748 = vld [vmem:[%s3 + $0x4] ss:$0 sm:$0xff]
    %v749 = vpack.c.bf16 %v731, %v731
    %v766 = vunpack.c.l.b16 %v732
    %v767 = vunpack.c.l.b16 %v733
    %v768 = vunpack.c.l.b16 %v734
    %v769 = vunpack.c.l.b16 %v735
    %v770 = vunpack.c.l.b16 %v736
    %v771 = vunpack.c.l.b16 %v737
    %v772 = vunpack.c.l.b16 %v738
    %v773 = vunpack.c.l.b16 %v739
    %v774 = vunpack.c.l.b16 %v740
    %v775 = vunpack.c.l.b16 %v741
    %v776 = vunpack.c.l.b16 %v742
    %v777 = vunpack.c.l.b16 %v743
    %v778 = vunpack.c.l.b16 %v744
    %v779 = vunpack.c.l.b16 %v745
    %v780 = vunpack.c.l.b16 %v746
    %v781 = vunpack.c.l.b16 %v747
    %v782 = vpack.c.b16 %v767, %v766
    %v783 = vpack.c.b16 %v769, %v768
    %v784 = vpack.c.b16 %v771, %v770
    %v785 = vpack.c.b16 %v773, %v772
    %v786 = vpack.c.b16 %v775, %v774
    %v787 = vpack.c.b16 %v777, %v776
    %v788 = vpack.c.b16 %v779, %v778
    %v789 = vpack.c.b16 %v781, %v780
    %798 = vmatprep.subr.bf16.mxu0 0
    %799 = vmatpush1.bf16.msra.mxu0 %v789
    %800 = vmatprep.subr.bf16.mxu0 0
    %801 = vmatpush1.bf16.msra.mxu0 %v788
    %802 = vmatprep.subr.bf16.mxu0 0
    %803 = vmatpush1.bf16.msra.mxu0 %v787
    %804 = vmatprep.subr.bf16.mxu0 0
    %805 = vmatpush1.bf16.msra.mxu0 %v786
    %806 = vmatprep.subr.bf16.mxu0 0
    %807 = vmatpush1.bf16.msra.mxu0 %v785
    %808 = vmatprep.subr.bf16.mxu0 0
    %809 = vmatpush1.bf16.msra.mxu0 %v784
    %810 = vmatprep.subr.bf16.mxu0 0
    %811 = vmatpush1.bf16.msra.mxu0 %v783
    %812 = vmatprep.subr.bf16.mxu0 0
    %813 = vmatpush1.bf16.msra.mxu0 %v782
    %814 = vmatprep.subr.bf16.mxu0 0
    %815 = vmatpush2.bf16.msra.mxu0 0
    %816 = vmatprep.subr.bf16.mxu0 0
    %817 = vmatpush2.bf16.msra.mxu0 0
    %818 = vmatprep.subr.bf16.mxu0 0
    %819 = vmatpush2.bf16.msra.mxu0 0
    %820 = vmatprep.subr.bf16.mxu0 0
    %821 = vmatpush2.bf16.msra.mxu0 0
    %822 = vmatprep.subr.bf16.mxu0 0
    %823 = vmatpush2.bf16.msra.mxu0 0
    %824 = vmatprep.subr.bf16.mxu0 0
    %825 = vmatpush2.bf16.msra.mxu0 0
    %826 = vmatprep.subr.bf16.mxu0 0
    %827 = vmatpush2.bf16.msra.mxu0 0
    %828 = vmatprep.subr.bf16.mxu0 0
    %829 = vmatpush2.bf16.msra.mxu0 0
    %830 = vmatprep.mubr.bf16.mxu0 0
    %831 = vmatmul.mubr.bf16.gmra.mxu0 %v749
    %v832 = vpop.f32.mrf.mxu0
    %v833 = vadd.f32 %v748, %v832
    %v834 = vpop.f32.mrf.mxu0
    %v835 = vpop.f32.mrf.mxu0
    %v836 = vpop.f32.mrf.mxu0
    %837 = vdwg.mxu0
    %v838 = vmax.f32 %v833, 0.0
    %v839 = vld [vmem:[#allocation2 + $0x100] sm:$0xf]
    %v840 = vld [vmem:[#allocation2 + $0x104] sm:$0xf]
    %v841 = vld [vmem:[#allocation2 + $0x108] sm:$0xf]
    %v842 = vld [vmem:[#allocation2 + $0x10c] sm:$0xf]
    %v843 = vld [vmem:[#allocation2 + $0x110] sm:$0xf]
    %v844 = vld [vmem:[#allocation2 + $0x114] sm:$0xf]
    %v845 = vld [vmem:[#allocation2 + $0x118] sm:$0xf]
    %v846 = vld [vmem:[#allocation2 + $0x11c] sm:$0xf]
    %v847 = vld [vmem:[#allocation2 + $0x120] sm:$0xf]
    %v848 = vld [vmem:[#allocation2 + $0x124] sm:$0xf]
    %v849 = vld [vmem:[#allocation2 + $0x128] sm:$0xf]
    %v850 = vld [vmem:[#allocation2 + $0x12c] sm:$0xf]
    %v851 = vld [vmem:[#allocation2 + $0x130] sm:$0xf]
    %v852 = vld [vmem:[#allocation2 + $0x134] sm:$0xf]
    %v853 = vld [vmem:[#allocation2 + $0x138] sm:$0xf]
    %v854 = vld [vmem:[#allocation2 + $0x13c] sm:$0xf]
    %v855 = vld [vmem:[%s3 + $0x5] ss:$0 sm:$0xff]
    %v856 = vpack.c.bf16 %v838, %v838
    %v873 = vunpack.c.l.b16 %v839
    %v874 = vunpack.c.l.b16 %v840
    %v875 = vunpack.c.l.b16 %v841
    %v876 = vunpack.c.l.b16 %v842
    %v877 = vunpack.c.l.b16 %v843
    %v878 = vunpack.c.l.b16 %v844
    %v879 = vunpack.c.l.b16 %v845
    %v880 = vunpack.c.l.b16 %v846
    %v881 = vunpack.c.l.b16 %v847
    %v882 = vunpack.c.l.b16 %v848
    %v883 = vunpack.c.l.b16 %v849
    %v884 = vunpack.c.l.b16 %v850
    %v885 = vunpack.c.l.b16 %v851
    %v886 = vunpack.c.l.b16 %v852
    %v887 = vunpack.c.l.b16 %v853
    %v888 = vunpack.c.l.b16 %v854
    %v889 = vpack.c.b16 %v874, %v873
    %v890 = vpack.c.b16 %v876, %v875
    %v891 = vpack.c.b16 %v878, %v877
    %v892 = vpack.c.b16 %v880, %v879
    %v893 = vpack.c.b16 %v882, %v881
    %v894 = vpack.c.b16 %v884, %v883
    %v895 = vpack.c.b16 %v886, %v885
    %v896 = vpack.c.b16 %v888, %v887
    %905 = vmatprep.subr.bf16.mxu0 0
    %906 = vmatpush1.bf16.msra.mxu0 %v896
    %907 = vmatprep.subr.bf16.mxu0 0
    %908 = vmatpush1.bf16.msra.mxu0 %v895
    %909 = vmatprep.subr.bf16.mxu0 0
    %910 = vmatpush1.bf16.msra.mxu0 %v894
    %911 = vmatprep.subr.bf16.mxu0 0
    %912 = vmatpush1.bf16.msra.mxu0 %v893
    %913 = vmatprep.subr.bf16.mxu0 0
    %914 = vmatpush1.bf16.msra.mxu0 %v892
    %915 = vmatprep.subr.bf16.mxu0 0
    %916 = vmatpush1.bf16.msra.mxu0 %v891
    %917 = vmatprep.subr.bf16.mxu0 0
    %918 = vmatpush1.bf16.msra.mxu0 %v890
    %919 = vmatprep.subr.bf16.mxu0 0
    %920 = vmatpush1.bf16.msra.mxu0 %v889
    %921 = vmatprep.subr.bf16.mxu0 0
    %922 = vmatpush2.bf16.msra.mxu0 0
    %923 = vmatprep.subr.bf16.mxu0 0
    %924 = vmatpush2.bf16.msra.mxu0 0
    %925 = vmatprep.subr.bf16.mxu0 0
    %926 = vmatpush2.bf16.msra.mxu0 0
    %927 = vmatprep.subr.bf16.mxu0 0
    %928 = vmatpush2.bf16.msra.mxu0 0
    %929 = vmatprep.subr.bf16.mxu0 0
    %930 = vmatpush2.bf16.msra.mxu0 0
    %931 = vmatprep.subr.bf16.mxu0 0
    %932 = vmatpush2.bf16.msra.mxu0 0
    %933 = vmatprep.subr.bf16.mxu0 0
    %934 = vmatpush2.bf16.msra.mxu0 0
    %935 = vmatprep.subr.bf16.mxu0 0
    %936 = vmatpush2.bf16.msra.mxu0 0
    %937 = vmatprep.mubr.bf16.mxu0 0
    %938 = vmatmul.mubr.bf16.gmra.mxu0 %v856
    %v939 = vpop.f32.mrf.mxu0
    %v940 = vadd.f32 %v855, %v939
    %v941 = vpop.f32.mrf.mxu0
    %v942 = vpop.f32.mrf.mxu0
    %v943 = vpop.f32.mrf.mxu0
    %944 = vdwg.mxu0
    %945 = vst [vmem:[%s4] sm:$0xff] %v940
    // Predicated region
    $region26: #{forward.1} parent=1 // pred_check
      _
    $region27: #{forward.1} parent=1 // pred_check_branch
      %947 = sbr.rel (0) target = $region29
    $region28: #{forward.1} parent=1 // pred_region
      _
    $region29: #{forward.1} parent=1 // pred_fallthru
      _
    // Predicated region
    $region30: #{forward.1} parent=1 // pred_check
      _
    $region31: #{forward.1} parent=1 // pred_check_branch
      %949 = sbr.rel (0) target = $region33
    $region32: #{forward.1} parent=1 // pred_region
      _
    $region33: #{forward.1} parent=1 // pred_fallthru
      _
    %950 = vsyncpa [#allocation3], 1
    %951 = vsyncpa [#allocation5], 1

</llo_original>
